<compile_context>
chip_gen: v6e
topology: v6e:2x2x1
jax: 0.10.0
libtpu: 0.0.40
codegen_flags: <defaults>
</compile_context>

<pallas_src>
import functools

import jax
import jax.numpy as jnp
from jax.experimental import pallas as pl
from jax.experimental.pallas import tpu as pltpu


def _round_up(v, m):
    return ((v + m - 1) // m) * m


def _categorical_kernel(x_ref, wt_ref, b_ref, logp_ref, mode_ref, lse_ref):
    """One batch tile: linear -> log-softmax -> first-max argmax."""
    x = x_ref[...]                        # (tb, K)  f32
    wt = wt_ref[...]                      # (K, N)   f32, MXU-native layout
    b = b_ref[...]                        # (1, N)   f32

    logits = jnp.dot(x, wt, preferred_element_type=jnp.float32) + b

    # Numerically stable log-softmax, all in f32.
    m = jnp.max(logits, axis=-1, keepdims=True)
    e = jnp.exp(logits - m)
    denom = jnp.sum(e, axis=-1, keepdims=True)
    lse = m + jnp.log(denom)              # raw logsumexp per row
    logp_ref[...] = logits - lse          # FixedCategorical's `.logits`
    lse_ref[...] = lse

    # mode(): first-max-index argmax over the class dim.
    n = logits.shape[-1]
    col = jax.lax.broadcasted_iota(jnp.int32, logits.shape, dimension=1)
    is_max = logits == m
    mode_ref[...] = jnp.min(jnp.where(is_max, col, jnp.int32(n)),
                            axis=-1, keepdims=True)


def prepare_params(weight, bias):
    """One-time parameter plumbing, hoisted out of the per-call path.

    weight: (N, K) torch nn.Linear layout -> (K, N) MXU-native.
    bias:   (N,) -> (1, N).
    """
    wt = jnp.asarray(weight, jnp.float32).T
    b2d = jnp.asarray(bias, jnp.float32).reshape(1, -1)
    return wt, b2d


@functools.partial(jax.jit, static_argnames=("block_batch",))
def categorical_forward(x, wt, b2d, *, block_batch=1024):
    """Returns (log_probs, probs, mode, lse).

    log_probs is FixedCategorical's `.logits`; probs = exp(log_probs); the raw
    linear output is recoverable as log_probs + lse.
    """
    B, K = x.shape
    N = wt.shape[1]

    # Batch tile: full-extent for small B, otherwise a multiple of 8.
    tb = min(block_batch, B)
    if tb < B:
        tb = max((tb // 8) * 8, 8)
    elif B >= 16:
        # Ensure >= 2 grid steps so v7x's two TensorCores both get work.
        half = _round_up(pl.cdiv(B, 2), 8)
        if half < B:
            tb = half
    grid = (pl.cdiv(B, tb),)

    out_shapes = (
        jax.ShapeDtypeStruct((B, N), jnp.float32),  # log_probs
        jax.ShapeDtypeStruct((B, 1), jnp.int32),    # mode
        jax.ShapeDtypeStruct((B, 1), jnp.float32),  # logsumexp
    )
    in_specs = [
        pl.BlockSpec((tb, K), lambda i: (i, 0)),    # x: streamed per batch tile
        pl.BlockSpec((K, N), lambda i: (0, 0)),     # weight: VMEM-resident
        pl.BlockSpec((1, N), lambda i: (0, 0)),     # bias:   VMEM-resident
    ]
    out_specs = (
        pl.BlockSpec((tb, N), lambda i: (i, 0)),
        pl.BlockSpec((tb, 1), lambda i: (i, 0)),
        pl.BlockSpec((tb, 1), lambda i: (i, 0)),
    )

    logp, mode, lse = pl.pallas_call(
        _categorical_kernel,
        out_shape=out_shapes,
        grid=grid,
        in_specs=in_specs,
        out_specs=out_specs,
        compiler_params=pltpu.CompilerParams(
            dimension_semantics=("parallel",),       # megacore on v7x
            vmem_limit_bytes=32 * 1024 * 1024,
        ),
    )(x, wt, b2d)

    probs = jnp.exp(logp)   # exact, on the already-small (B, N) array
    return logp, probs, mode, lse


def init_params(key, num_inputs, num_outputs):
    """Matches nn.init.orthogonal_(gain=0.01) on weight, zeros on bias."""
    w = jax.nn.initializers.orthogonal(scale=0.01)(
        key, (num_outputs, num_inputs), jnp.float32)
    b = jnp.zeros((num_outputs,), jnp.float32)
    return w, b


if __name__ == "__main__":
    num_inputs, num_outputs, batch = 32, 8, 2

    key = jax.random.PRNGKey(0)
    kx, kw = jax.random.split(key)
    x = jax.random.normal(kx, (batch, num_inputs), jnp.float32)
    weight, bias = init_params(kw, num_inputs, num_outputs)

    wt, b2d = prepare_params(weight, bias)
    log_probs, probs, mode, lse = jax.block_until_ready(
        categorical_forward(x, wt, b2d))

    # Pure-JAX reference of the same semantics.
    ref_logits = jnp.dot(x, weight.T,
                         precision=jax.lax.Precision.HIGHEST) + bias
    ref_logp = jax.nn.log_softmax(ref_logits, axis=-1)
    ref_probs = jax.nn.softmax(ref_logits, axis=-1)
    ref_mode = jnp.argmax(ref_probs, axis=-1, keepdims=True).astype(jnp.int32)

    assert log_probs.shape == (batch, num_outputs)
    assert probs.shape == (batch, num_outputs)
    assert mode.shape == (batch, 1) and mode.dtype == jnp.int32
    assert lse.shape == (batch, 1)

    assert jnp.allclose(log_probs, ref_logp, atol=1e-4)
    assert jnp.allclose(probs, ref_probs, atol=1e-4)
    assert jnp.array_equal(mode, ref_mode)
    # Raw linear output recoverable from the emitted quantities.
    assert jnp.allclose(log_probs + lse, ref_logits, atol=1e-4)

    print("KERNEL_OK")
</pallas_src>

<mosaic_0001>
module attributes {stable_mosaic.version = 11 : i64} {
  func.func @_categorical_kernel(%arg0: i32, %arg1: memref<2x32xf32, #tpu.memory_space<vmem>>, %arg2: memref<32x8xf32, #tpu.memory_space<vmem>>, %arg3: memref<1x8xf32, #tpu.memory_space<vmem>>, %arg4: memref<2x8xf32, #tpu.memory_space<vmem>>, %arg5: memref<2x1xi32, #tpu.memory_space<vmem>>, %arg6: memref<2x1xf32, #tpu.memory_space<vmem>>) attributes {dimension_semantics = [#tpu.dimension_semantics<parallel>], iteration_bounds = array<i64: 1>, scalar_prefetch = 0 : i64, scratch_operands = 0 : i64, tpu.core_type = #tpu.core_type<tc>, window_params = [{transform_indices = @transform_0, window_bounds = array<i64: 2, 32>}, {pipeline_mode = #tpu.pipeline_mode<synchronous>, transform_indices = @transform_1, window_bounds = array<i64: 32, 8>}, {pipeline_mode = #tpu.pipeline_mode<synchronous>, transform_indices = @transform_2, window_bounds = array<i64: 1, 8>}, {transform_indices = @transform_3, window_bounds = array<i64: 2, 8>}, {transform_indices = @transform_4, window_bounds = array<i64: 2, 1>}, {transform_indices = @transform_5, window_bounds = array<i64: 2, 1>}]} {
    %c0 = arith.constant 0 : index
    %c0_0 = arith.constant 0 : index
    %0 = vector.load %arg1[%c0, %c0_0] : memref<2x32xf32, #tpu.memory_space<vmem>>, vector<2x32xf32>
    %c0_1 = arith.constant 0 : index
    %c0_2 = arith.constant 0 : index
    %1 = vector.load %arg2[%c0_1, %c0_2] : memref<32x8xf32, #tpu.memory_space<vmem>>, vector<32x8xf32>
    %c0_3 = arith.constant 0 : index
    %c0_4 = arith.constant 0 : index
    %2 = vector.load %arg3[%c0_3, %c0_4] : memref<1x8xf32, #tpu.memory_space<vmem>>, vector<1x8xf32>
    %cst = arith.constant dense<0.000000e+00> : vector<2x8xf32>
    %3 = tpu.matmul %0, %1, %cst {dimension_numbers = #tpu.dot_dimension_numbers<[1], [0], [0], [1], [0, 0, 1, 1], [], []>} : vector<2x32xf32>, vector<32x8xf32>, vector<2x8xf32> -> vector<2x8xf32>
    %4 = vector.broadcast %2 : vector<1x8xf32> to vector<2x8xf32>
    %5 = arith.addf %3, %4 : vector<2x8xf32>
    %cst_5 = arith.constant dense<0xFF800000> : vector<2xf32>
    %6 = vector.multi_reduction <maximumf>, %5, %cst_5 [1] : vector<2x8xf32> to vector<2xf32>
    %7 = vector.shape_cast %6 : vector<2xf32> to vector<2x1xf32>
    %8 = vector.broadcast %7 : vector<2x1xf32> to vector<2x8xf32>
    %9 = arith.subf %5, %8 : vector<2x8xf32>
    %10 = math.exp %9 : vector<2x8xf32>
    %cst_6 = arith.constant dense<0.000000e+00> : vector<2xf32>
    %11 = vector.multi_reduction <add>, %10, %cst_6 [1] : vector<2x8xf32> to vector<2xf32>
    %12 = vector.shape_cast %11 : vector<2xf32> to vector<2x1xf32>
    %13 = math.log %12 : vector<2x1xf32>
    %14 = arith.addf %7, %13 : vector<2x1xf32>
    %15 = vector.broadcast %14 : vector<2x1xf32> to vector<2x8xf32>
    %16 = arith.subf %5, %15 : vector<2x8xf32>
    %c0_7 = arith.constant 0 : index
    %c0_8 = arith.constant 0 : index
    %17 = vector.load %arg4[%c0_7, %c0_8] : memref<2x8xf32, #tpu.memory_space<vmem>>, vector<2x8xf32>
    tpu.vector_store %arg4[%c0_7, %c0_8], %16 {strides = array<i32>} : memref<2x8xf32, #tpu.memory_space<vmem>>, vector<2x8xf32>,
    %c0_9 = arith.constant 0 : index
    %c0_10 = arith.constant 0 : index
    %18 = vector.load %arg6[%c0_9, %c0_10] : memref<2x1xf32, #tpu.memory_space<vmem>>, vector<2x1xf32>
    tpu.vector_store %arg6[%c0_9, %c0_10], %14 {strides = array<i32>} : memref<2x1xf32, #tpu.memory_space<vmem>>, vector<2x1xf32>,
    %19 = tpu.iota {dimensions = array<i32: 1>} : vector<2x8xi32>
    %20 = vector.broadcast %7 : vector<2x1xf32> to vector<2x8xf32>
    %21 = arith.cmpf oeq, %5, %20 : vector<2x8xf32>
    %c8_i32 = arith.constant 8 : i32
    %22 = vector.broadcast %c8_i32 : i32 to vector<2x8xi32>
    %23 = arith.select %21, %19, %22 : vector<2x8xi1>, vector<2x8xi32>
    %cst_11 = arith.constant dense<2147483647> : vector<2xi32>
    %24 = vector.multi_reduction <minsi>, %23, %cst_11 [1] : vector<2x8xi32> to vector<2xi32>
    %25 = vector.shape_cast %24 : vector<2xi32> to vector<2x1xi32>
    %c0_12 = arith.constant 0 : index
    %c0_13 = arith.constant 0 : index
    %26 = vector.load %arg5[%c0_12, %c0_13] : memref<2x1xi32, #tpu.memory_space<vmem>>, vector<2x1xi32>
    tpu.vector_store %arg5[%c0_12, %c0_13], %25 {strides = array<i32>} : memref<2x1xi32, #tpu.memory_space<vmem>>, vector<2x1xi32>,
    return
  }
  func.func @transform_0(%arg0: i32) -> (i32, i32) {
    %c0_i32 = arith.constant 0 : i32
    %c0_i32_0 = arith.constant 0 : i32
    return %arg0, %c0_i32 : i32, i32
  }
  func.func @transform_1(%arg0: i32) -> (i32, i32) {
    %c0_i32 = arith.constant 0 : i32
    %c0_i32_0 = arith.constant 0 : i32
    %c0_i32_1 = arith.constant 0 : i32
    return %c0_i32, %c0_i32_0 : i32, i32
  }
  func.func @transform_2(%arg0: i32) -> (i32, i32) {
    %c0_i32 = arith.constant 0 : i32
    %c0_i32_0 = arith.constant 0 : i32
    %c0_i32_1 = arith.constant 0 : i32
    return %c0_i32, %c0_i32_0 : i32, i32
  }
  func.func @transform_3(%arg0: i32) -> (i32, i32) {
    %c0_i32 = arith.constant 0 : i32
    %c0_i32_0 = arith.constant 0 : i32
    return %arg0, %c0_i32 : i32, i32
  }
  func.func @transform_4(%arg0: i32) -> (i32, i32) {
    %c0_i32 = arith.constant 0 : i32
    %c0_i32_0 = arith.constant 0 : i32
    return %arg0, %c0_i32 : i32, i32
  }
  func.func @transform_5(%arg0: i32) -> (i32, i32) {
    %c0_i32 = arith.constant 0 : i32
    %c0_i32_0 = arith.constant 0 : i32
    return %arg0, %c0_i32 : i32, i32
  }
}

</mosaic_0001>

<llo_original>
// kernel: categorical_forward.1
$region0: #{categorical_forward.1}
  #allocation0 [shape = 'u32[]', space=smem, size = 0x4, offset = 0x4, fixed_abs, tag = 'smem constant byte address 0x4 - core index']
  #allocation1 [shape = 'u32[144,128]{1,0:T(1,128)}', space=vmem, size = 0x12000, scoped, tag = 'internal scratch']
  %s0 = inlined_call_operand.vmem [shape: f32[2,32], index: 0, kind: input, shape index: {}]
  %s1 = inlined_call_operand.vmem [shape: f32[32,8], index: 1, kind: input, shape index: {}]
  %s2 = inlined_call_operand.vmem [shape: f32[1,8], index: 2, kind: input, shape index: {}]
  %s3 = inlined_call_operand.vmem [shape: f32[2,8], index: 3, kind: output, shape index: {0}]
  %s4 = inlined_call_operand.vmem [shape: s32[2,1], index: 4, kind: output, shape index: {1}]
  %s5 = inlined_call_operand.vmem [shape: f32[2,1], index: 5, kind: output, shape index: {2}]
  %6 = xla_tuple %s3, %s4, %s5
  %s7 = sld [smem:[#allocation0]]
  $region38: #{categorical_forward.1} parent=0
    _
  %s9 = ssub.s32 1, %s7
  %s10 = scalar_select 0, %s9, %s7
  // Predicated region
  $region2: #{categorical_forward.1} parent=0 // pred_check
    _
  $region3: #{categorical_forward.1} parent=0 // pred_check_branch
    %12 = sbr.rel (0) target = $region5
  $region4: #{categorical_forward.1} parent=0 // pred_region
    _
  $region5: #{categorical_forward.1} parent=0 // pred_fallthru
    _
  // Predicated region
  $region6: #{categorical_forward.1} parent=0 // pred_check
    _
  $region7: #{categorical_forward.1} parent=0 // pred_check_branch
    %14 = sbr.rel (0) target = $region9
  $region8: #{categorical_forward.1} parent=0 // pred_region
    _
  $region9: #{categorical_forward.1} parent=0 // pred_fallthru
    _
  // Predicated region
  $region10: #{categorical_forward.1} parent=0 // pred_check
    _
  $region11: #{categorical_forward.1} parent=0 // pred_check_branch
    %16 = sbr.rel (0) target = $region13
  $region12: #{categorical_forward.1} parent=0 // pred_region
    _
  $region13: #{categorical_forward.1} parent=0 // pred_fallthru
    _
  %v17 = vld [vmem:[%s0] sm:$0x3]
  %v18 = vld [vmem:[%s1] sm:$0xff]
  %v19 = vld [vmem:[%s1 + $0x8] sm:$0xff]
  %v20 = vld [vmem:[%s1 + $0x10] sm:$0xff]
  %v21 = vld [vmem:[%s1 + $0x18] sm:$0xff]
  %v22 = vld [vmem:[%s2] sm:$0x1]
  %v24 = vlaneseq
  %v25 = vshrl.u32 %v24, 7
  %v26 = vsub.s32 0, %v25
  %v27 = vrot.slane %v22, %v26
  %vm29 = vcmask 261120
  %v31 = vsel %vm29, %v17, 0
  %33 = vmatprep.subr.mxu0 0.0
  %34 = vmatpush1.msra.mxu0 0.0
  %35 = vmatprep.subr.mxu0 0.0
  %36 = vmatpush1.msra.mxu0 0.0
  %37 = vmatprep.subr.mxu0 0.0
  %38 = vmatpush1.msra.mxu0 0.0
  %39 = vmatprep.subr.mxu0 0.0
  %40 = vmatpush1.msra.mxu0 0.0
  %41 = vmatprep.subr.mxu0 0.0
  %42 = vmatpush1.msra.mxu0 0.0
  %43 = vmatprep.subr.mxu0 0.0
  %44 = vmatpush1.msra.mxu0 0.0
  %45 = vmatprep.subr.mxu0 0.0
  %46 = vmatpush1.msra.mxu0 0.0
  %47 = vmatprep.subr.mxu0 0.0
  %48 = vmatpush1.msra.mxu0 0.0
  %49 = vmatprep.subr.mxu0 0.0
  %50 = vmatpush1.msra.mxu0 0.0
  %51 = vmatprep.subr.mxu0 0.0
  %52 = vmatpush1.msra.mxu0 0.0
  %53 = vmatprep.subr.mxu0 0.0
  %54 = vmatpush1.msra.mxu0 0.0
  %55 = vmatprep.subr.mxu0 0.0
  %56 = vmatpush1.msra.mxu0 0.0
  %57 = vmatprep.subr.mxu0 0.0
  %58 = vmatpush1.msra.mxu0 %v21
  %59 = vmatprep.subr.mxu0 0.0
  %60 = vmatpush1.msra.mxu0 %v20
  %61 = vmatprep.subr.mxu0 0.0
  %62 = vmatpush1.msra.mxu0 %v19
  %63 = vmatprep.subr.mxu0 0.0
  %64 = vmatpush1.msra.mxu0 %v18
  %65 = vmatprep.subr.mxu0 0.0
  %66 = vmatpush2.msra.mxu0 0.0
  %67 = vmatprep.subr.mxu0 0.0
  %68 = vmatpush2.msra.mxu0 0.0
  %69 = vmatprep.subr.mxu0 0.0
  %70 = vmatpush2.msra.mxu0 0.0
  %71 = vmatprep.subr.mxu0 0.0
  %72 = vmatpush2.msra.mxu0 0.0
  %73 = vmatprep.subr.mxu0 0.0
  %74 = vmatpush2.msra.mxu0 0.0
  %75 = vmatprep.subr.mxu0 0.0
  %76 = vmatpush2.msra.mxu0 0.0
  %77 = vmatprep.subr.mxu0 0.0
  %78 = vmatpush2.msra.mxu0 0.0
  %79 = vmatprep.subr.mxu0 0.0
  %80 = vmatpush2.msra.mxu0 0.0
  %81 = vmatprep.subr.mxu0 0.0
  %82 = vmatpush2.msra.mxu0 0.0
  %83 = vmatprep.subr.mxu0 0.0
  %84 = vmatpush2.msra.mxu0 0.0
  %85 = vmatprep.subr.mxu0 0.0
  %86 = vmatpush2.msra.mxu0 0.0
  %87 = vmatprep.subr.mxu0 0.0
  %88 = vmatpush2.msra.mxu0 0.0
  %89 = vmatprep.subr.mxu0 0.0
  %90 = vmatpush2.msra.mxu0 0.0
  %91 = vmatprep.subr.mxu0 0.0
  %92 = vmatpush2.msra.mxu0 0.0
  %93 = vmatprep.subr.mxu0 0.0
  %94 = vmatpush2.msra.mxu0 0.0
  %95 = vmatprep.subr.mxu0 0.0
  %96 = vmatpush2.msra.mxu0 0.0
  %97 = vmatprep.mubr.f32.mxu0 0.0
  %98 = vmatmul.mubr.f32.gmra.mxu0 %v31
  %v99 = vpop.f32.mrf.mxu0
  %v100 = vadd.f32 %v27, %v99
  %v101 = vpop.f32.mrf.mxu0
  %102 = vdwg.mxu0
  %vm103 = vcmask 58368
  %v104 = vsel %vm103, %v100, -inf
  %105 = vmax.xlane.f32.xlu0 %v104
  %v106 = vpop.xlane.xlu0 %105
  %v107 = vsub.f32 %v100, %v106
  %v108 = vmul.f32 %v107, 1.442695
  %v109 = vpow.pop %v108
  %v110 = vsel %vm103, %v109, 0.0
  %111 = vadd.xlane.f32.xlu0 %v110
  %v112 = vpop.xlane.xlu0 %111
  %v113 = vlog2.pop %v112
  %v114 = vmul.f32 %v113, 0.6931472
  %v115 = vadd.f32 %v106, %v114
  %v116 = vsub.f32 %v100, %v115
  %117 = vst.msk [vmem:[%s3] sm:$0x3] %vm103, %v116
  %vm118 = vcmask 1024
  %119 = vst.msk [vmem:[%s5] sm:$0x3] %vm118, %v115
  %v120 = vlaneseq
  %v121 = vand.u32 %v120, 127
  %vm122 = vcmp.eq.f32.partialorder %v100, %v106
  %v123 = vsel %vm122, %v121, 8
  %v124 = vsel %vm103, %v123, 2147483647
  %v125 = vand.u32 %v124, 65535
  %v126 = vshra.s32 %v124, 16
  %v127 = vcvt.s32.f32 %v125
  %v128 = vcvt.s32.f32 %v126
  %129 = vmin.xlane.f32.xlu0 %v128
  %v130 = vpop.xlane.xlu0 %129
  %vm131 = vcmp.eq.f32.partialorder %v128, %v130
  %v132 = vsel %vm131, %v127, inf
  %133 = vmin.xlane.f32.xlu0 %v132
  %v134 = vpop.xlane.xlu0 %133
  %v135 = vcvt.f32.s32 %v134
  %v136 = vcvt.f32.s32 %v130
  %v137 = vshll.u32 %v136, 16
  %v138 = vadd.s32 %v137, %v135
  %139 = vst.msk [vmem:[%s4] sm:$0x3] %vm118, %v138
  // Predicated region
  $region14: #{categorical_forward.1} parent=0 // pred_check
    _
  $region15: #{categorical_forward.1} parent=0 // pred_check_branch
    %141 = sbr.rel (0) target = $region17
  $region16: #{categorical_forward.1} parent=0 // pred_region
    _
  $region17: #{categorical_forward.1} parent=0 // pred_fallthru
    _
  // Predicated region
  $region18: #{categorical_forward.1} parent=0 // pred_check
    _
  $region19: #{categorical_forward.1} parent=0 // pred_check_branch
    %143 = sbr.rel (0) target = $region21
  $region20: #{categorical_forward.1} parent=0 // pred_region
    _
  $region21: #{categorical_forward.1} parent=0 // pred_fallthru
    _
  // Predicated region
  $region22: #{categorical_forward.1} parent=0 // pred_check
    _
  $region23: #{categorical_forward.1} parent=0 // pred_check_branch
    %145 = sbr.rel (0) target = $region25
  $region24: #{categorical_forward.1} parent=0 // pred_region
    _
  $region25: #{categorical_forward.1} parent=0 // pred_fallthru
    _
  // Predicated region
  $region26: #{categorical_forward.1} parent=0 // pred_check
    _
  $region27: #{categorical_forward.1} parent=0 // pred_check_branch
    %147 = sbr.rel (0) target = $region29
  $region28: #{categorical_forward.1} parent=0 // pred_region
    _
  $region29: #{categorical_forward.1} parent=0 // pred_fallthru
    _
  // Predicated region
  $region30: #{categorical_forward.1} parent=0 // pred_check
    _
  $region31: #{categorical_forward.1} parent=0 // pred_check_branch
    %149 = sbr.rel (0) target = $region33
  $region32: #{categorical_forward.1} parent=0 // pred_region
    _
  $region33: #{categorical_forward.1} parent=0 // pred_fallthru
    _
  // Predicated region
  $region34: #{categorical_forward.1} parent=0 // pred_check
    _
  $region35: #{categorical_forward.1} parent=0 // pred_check_branch
    %151 = sbr.rel (0) target = $region37
  $region36: #{categorical_forward.1} parent=0 // pred_region
    _
  $region37: #{categorical_forward.1} parent=0 // pred_fallthru
    _

</llo_original>
